<compile_context>
chip_gen: v5e
topology: v5e:2x2
jax: 0.10.0
libtpu: 0.0.40
codegen_flags: <defaults>
</compile_context>

<pallas_src>
import functools

import jax
import jax.numpy as jnp
from jax.experimental import pallas as pl
from jax.experimental.pallas import tpu as pltpu

LANE = 128


def _round_up(n: int, m: int) -> int:
    return ((n + m - 1) // m) * m


def _dqn_kernel(x_ref, w_ref, b_ref, o_ref, *, in_size):
    # x_ref: (TB, in_size) f32 | w_ref: (3, Hp, Hp) bf16 | b_ref: (3, Hp) f32
    # o_ref: (TB, Hp) bf16
    x = x_ref[...].astype(jnp.bfloat16)
    # Layer 1: Linear + ReLU.  Static row slice of the padded weight block so
    # only the in_size real rows take part in the contraction (16 bf16 rows =
    # one aligned sublane tile).  bf16 MXU matmul, f32 accumulate; elementwise
    # path stays f32 (v5e-friendly).
    h = (jnp.dot(x, w_ref[0, :in_size, :], preferred_element_type=jnp.float32)
         + b_ref[0:1, :])
    h = jnp.maximum(h, 0.0).astype(jnp.bfloat16)
    # Layer 2: Linear + ReLU.
    h = jnp.dot(h, w_ref[1], preferred_element_type=jnp.float32) + b_ref[1:2, :]
    h = jnp.maximum(h, 0.0).astype(jnp.bfloat16)
    # Output layer: Linear (no activation).  Lane-dense (Hp-wide) unmasked bf16
    # store; real out_size columns are sliced back (fused) in the caller.
    o_ref[...] = (jnp.dot(h, w_ref[2], preferred_element_type=jnp.float32)
                  + b_ref[2:3, :]).astype(o_ref.dtype)


def pack_dqn_params(w1, b1, w2, b2, w3, b3):
    """One-time prep (hoisted out of the forward path): pad every feature dim
    to a common lane-aligned width, stack, and cast weights to bf16.
    w_i: (fan_in, fan_out) f32, b_i: (fan_out,) f32."""
    in_size, inner_size = w1.shape
    out_size = w3.shape[1]
    hp = _round_up(max(in_size, inner_size, out_size), LANE)

    def pad2(a):
        return jnp.pad(a, ((0, hp - a.shape[0]), (0, hp - a.shape[1])))

    w = jnp.stack([pad2(w1), pad2(w2), pad2(w3)]).astype(jnp.bfloat16)   # (3, hp, hp)
    b = jnp.stack([jnp.pad(bi, (0, hp - bi.shape[0]))
                   for bi in (b1, b2, b3)]).astype(jnp.float32)          # (3, hp)
    return w, b, out_size


def _pick_block_b(B: int) -> int:
    # Keep >=2 grid steps (v7x megacore sharding + DMA/compute overlap) while
    # making each tile as large as possible (amortize ~0.35us/step) and keeping
    # batch padding minimal.  v5e/v6e simply benefit from the large tile.
    bb = _round_up(pl.cdiv(B, 2), 8)
    return max(8, min(bb, 1024))


@functools.partial(jax.jit, static_argnames=("out_size", "block_b"))
def dqn_forward(x, w_packed, b_packed, out_size, block_b=None):
    """x: (B, in_size) f32; (w_packed, b_packed, out_size) from pack_dqn_params."""
    B, in_size = x.shape
    hp = w_packed.shape[-1]
    bb = _pick_block_b(B) if block_b is None else max(8, _round_up(block_b, 8))
    bp = _round_up(B, bb)
    x_p = x if bp == B else jnp.pad(x, ((0, bp - B), (0, 0)))

    grid = (bp // bb,)
    out_p = pl.pallas_call(
        functools.partial(_dqn_kernel, in_size=in_size),
        out_shape=jax.ShapeDtypeStruct((bp, hp), jnp.bfloat16),
        grid_spec=pltpu.PrefetchScalarGridSpec(
            num_scalar_prefetch=0,
            grid=grid,
            in_specs=[
                # x: streamed (double-buffered) per batch tile, unpadded lanes.
                pl.BlockSpec((bb, in_size), lambda i: (i, 0)),
                # Weights / biases: constant index_map -> VMEM-resident across
                # the grid; single buffer is enough.
                pl.BlockSpec((3, hp, hp), lambda i: (0, 0, 0),
                             pipeline_mode=pl.Buffered(1)),
                pl.BlockSpec((3, hp), lambda i: (0, 0),
                             pipeline_mode=pl.Buffered(1)),
            ],
            out_specs=pl.BlockSpec((bb, hp), lambda i: (i, 0)),
        ),
        compiler_params=pltpu.CompilerParams(
            # Batch tiles are independent -> shard across TensorCores on v7x.
            # VMEM stays well under the default scoped limit even at
            # block_b=2048; only raise vmem_limit_bytes if pushing past ~4k
            # rows on v5e.
            dimension_semantics=("parallel",)),
    )(x_p, w_packed, b_packed)

    # Drop batch/lane padding and restore f32; fused into this jit (no extra
    # standalone HBM pass).
    return out_p[:B, :out_size].astype(jnp.float32)


def init_linear_params(key, fan_in, fan_out):
    """nn.Linear-style uniform(-1/sqrt(fan_in), 1/sqrt(fan_in)); weight stored
    pre-transposed as (fan_in, fan_out), bias as (fan_out,)."""
    kw, kb = jax.random.split(key)
    bound = 1.0 / jnp.sqrt(jnp.float32(fan_in))
    w = jax.random.uniform(kw, (fan_in, fan_out), jnp.float32, -bound, bound)
    b = jax.random.uniform(kb, (fan_out,), jnp.float32, -bound, bound)
    return w, b


if __name__ == "__main__":
    # Module-consistent small shapes: in=16, inner=32, out=8; batch large enough
    # to exercise the batch grid (2 tiles of 128 rows with the auto block pick).
    B, in_size, inner_size, out_size = 256, 16, 32, 8

    key = jax.random.PRNGKey(0)
    kx, k1, k2, k3 = jax.random.split(key, 4)

    x = jax.random.normal(kx, (B, in_size), jnp.float32)
    w1, b1 = init_linear_params(k1, in_size, inner_size)
    w2, b2 = init_linear_params(k2, inner_size, inner_size)
    w3, b3 = init_linear_params(k3, inner_size, out_size)

    # One-time packing, hoisted out of the forward path.
    w_packed, b_packed, out_sz = pack_dqn_params(w1, b1, w2, b2, w3, b3)

    out = dqn_forward(x, w_packed, b_packed, out_size=out_sz)
    out = jax.block_until_ready(out)

    # Pure-JAX reference mimicking the kernel's numerics: bf16 storage of x /
    # weights / activations between layers, f32 accumulation, bf16 final store.
    def q(a):
        return a.astype(jnp.bfloat16).astype(jnp.float32)

    def ref(xv):
        h = jnp.maximum(q(xv) @ q(w1) + b1, 0.0)
        h = jnp.maximum(q(h) @ q(w2) + b2, 0.0)
        return q(q(h) @ q(w3) + b3)

    expected = ref(x)
    assert out.shape == (B, out_size)
    assert jnp.allclose(out, expected, atol=1e-2, rtol=1e-2), "mismatch vs reference"
    print("KERNEL_OK")
</pallas_src>

<mosaic_0001>
module attributes {stable_mosaic.version = 11 : i64} {
  func.func @_dqn_kernel(%arg0: i32, %arg1: memref<128x16xf32, #tpu.memory_space<vmem>>, %arg2: memref<3x128x128xbf16, #tpu.memory_space<vmem>>, %arg3: memref<3x128xf32, #tpu.memory_space<vmem>>, %arg4: memref<128x128xbf16, #tpu.memory_space<vmem>>) attributes {dimension_semantics = [#tpu.dimension_semantics<parallel>], iteration_bounds = array<i64: 2>, scalar_prefetch = 0 : i64, scratch_operands = 0 : i64, tpu.core_type = #tpu.core_type<tc>, window_params = [{transform_indices = @transform_0, window_bounds = array<i64: 128, 16>}, {pipeline_mode = #tpu.pipeline_mode<synchronous>, transform_indices = @transform_1, window_bounds = array<i64: 3, 128, 128>}, {pipeline_mode = #tpu.pipeline_mode<synchronous>, transform_indices = @transform_2, window_bounds = array<i64: 3, 128>}, {transform_indices = @transform_3, window_bounds = array<i64: 128, 128>}]} {
    %c0 = arith.constant 0 : index
    %c0_0 = arith.constant 0 : index
    %0 = vector.load %arg1[%c0, %c0_0] : memref<128x16xf32, #tpu.memory_space<vmem>>, vector<128x16xf32>
    %1 = arith.truncf %0 : vector<128x16xf32> to vector<128x16xbf16>
    %c0_1 = arith.constant 0 : index
    %c0_2 = arith.constant 0 : index
    %c0_3 = arith.constant 0 : index
    %2 = vector.load %arg2[%c0_1, %c0_2, %c0_3] : memref<3x128x128xbf16, #tpu.memory_space<vmem>>, vector<1x16x128xbf16>
    %3 = vector.shape_cast %2 : vector<1x16x128xbf16> to vector<16x128xbf16>
    %cst = arith.constant dense<0.000000e+00> : vector<128x128xf32>
    %4 = tpu.matmul %1, %3, %cst {dimension_numbers = #tpu.dot_dimension_numbers<[1], [0], [0], [1], [0, 0, 1, 1], [], []>} : vector<128x16xbf16>, vector<16x128xbf16>, vector<128x128xf32> -> vector<128x128xf32>
    %c0_4 = arith.constant 0 : index
    %c0_5 = arith.constant 0 : index
    %5 = vector.load %arg3[%c0_4, %c0_5] : memref<3x128xf32, #tpu.memory_space<vmem>>, vector<1x128xf32>
    %6 = vector.broadcast %5 : vector<1x128xf32> to vector<128x128xf32>
    %7 = arith.addf %4, %6 : vector<128x128xf32>
    %cst_6 = arith.constant 0.000000e+00 : f32
    %8 = vector.broadcast %cst_6 : f32 to vector<128x128xf32>
    %9 = arith.maximumf %7, %8 : vector<128x128xf32>
    %10 = arith.truncf %9 : vector<128x128xf32> to vector<128x128xbf16>
    %c1 = arith.constant 1 : index
    %c0_7 = arith.constant 0 : index
    %c0_8 = arith.constant 0 : index
    %11 = vector.load %arg2[%c1, %c0_7, %c0_8] : memref<3x128x128xbf16, #tpu.memory_space<vmem>>, vector<1x128x128xbf16>
    %12 = vector.shape_cast %11 : vector<1x128x128xbf16> to vector<128x128xbf16>
    %cst_9 = arith.constant dense<0.000000e+00> : vector<128x128xf32>
    %13 = tpu.matmul %10, %12, %cst_9 {dimension_numbers = #tpu.dot_dimension_numbers<[1], [0], [0], [1], [0, 0, 1, 1], [], []>} : vector<128x128xbf16>, vector<128x128xbf16>, vector<128x128xf32> -> vector<128x128xf32>
    %c1_10 = arith.constant 1 : index
    %c0_11 = arith.constant 0 : index
    %14 = vector.load %arg3[%c1_10, %c0_11] : memref<3x128xf32, #tpu.memory_space<vmem>>, vector<1x128xf32>
    %15 = vector.broadcast %14 : vector<1x128xf32> to vector<128x128xf32>
    %16 = arith.addf %13, %15 : vector<128x128xf32>
    %cst_12 = arith.constant 0.000000e+00 : f32
    %17 = vector.broadcast %cst_12 : f32 to vector<128x128xf32>
    %18 = arith.maximumf %16, %17 : vector<128x128xf32>
    %19 = arith.truncf %18 : vector<128x128xf32> to vector<128x128xbf16>
    %c2 = arith.constant 2 : index
    %c0_13 = arith.constant 0 : index
    %c0_14 = arith.constant 0 : index
    %20 = vector.load %arg2[%c2, %c0_13, %c0_14] : memref<3x128x128xbf16, #tpu.memory_space<vmem>>, vector<1x128x128xbf16>
    %21 = vector.shape_cast %20 : vector<1x128x128xbf16> to vector<128x128xbf16>
    %cst_15 = arith.constant dense<0.000000e+00> : vector<128x128xf32>
    %22 = tpu.matmul %19, %21, %cst_15 {dimension_numbers = #tpu.dot_dimension_numbers<[1], [0], [0], [1], [0, 0, 1, 1], [], []>} : vector<128x128xbf16>, vector<128x128xbf16>, vector<128x128xf32> -> vector<128x128xf32>
    %c2_16 = arith.constant 2 : index
    %c0_17 = arith.constant 0 : index
    %23 = vector.load %arg3[%c2_16, %c0_17] : memref<3x128xf32, #tpu.memory_space<vmem>>, vector<1x128xf32>
    %24 = vector.broadcast %23 : vector<1x128xf32> to vector<128x128xf32>
    %25 = arith.addf %22, %24 : vector<128x128xf32>
    %26 = arith.truncf %25 : vector<128x128xf32> to vector<128x128xbf16>
    %c0_18 = arith.constant 0 : index
    %c0_19 = arith.constant 0 : index
    %27 = vector.load %arg4[%c0_18, %c0_19] : memref<128x128xbf16, #tpu.memory_space<vmem>>, vector<128x128xbf16>
    tpu.vector_store %arg4[%c0_18, %c0_19], %26 {strides = array<i32>} : memref<128x128xbf16, #tpu.memory_space<vmem>>, vector<128x128xbf16>,
    return
  }
  func.func @transform_0(%arg0: i32) -> (i32, i32) {
    %c0_i32 = arith.constant 0 : i32
    %c0_i32_0 = arith.constant 0 : i32
    return %arg0, %c0_i32 : i32, i32
  }
  func.func @transform_1(%arg0: i32) -> (i32, i32, i32) {
    %c0_i32 = arith.constant 0 : i32
    %c0_i32_0 = arith.constant 0 : i32
    %c0_i32_1 = arith.constant 0 : i32
    %c0_i32_2 = arith.constant 0 : i32
    return %c0_i32, %c0_i32_0, %c0_i32_1 : i32, i32, i32
  }
  func.func @transform_2(%arg0: i32) -> (i32, i32) {
    %c0_i32 = arith.constant 0 : i32
    %c0_i32_0 = arith.constant 0 : i32
    %c0_i32_1 = arith.constant 0 : i32
    return %c0_i32, %c0_i32_0 : i32, i32
  }
  func.func @transform_3(%arg0: i32) -> (i32, i32) {
    %c0_i32 = arith.constant 0 : i32
    %c0_i32_0 = arith.constant 0 : i32
    return %arg0, %c0_i32 : i32, i32
  }
}

</mosaic_0001>

<llo_original>
// kernel: dqn_forward.1
$region0: #{dqn_forward.1}
  #allocation0 [shape = 'u32[]', space=smem, size = 0x4, offset = 0x4, fixed_abs, tag = 'smem constant byte address 0x4 - core index']
  #allocation1 [shape = 'u32[72,128]{1,0:T(1,128)}', space=vmem, size = 0x9000, scoped, tag = 'internal scratch']
  %s0 = inlined_call_operand.vmem [shape: f32[256,16], index: 0, kind: input, shape index: {}]
  %s1 = inlined_call_operand.vmem [shape: bf16[3,128,128], index: 1, kind: input, shape index: {}]
  %s2 = inlined_call_operand.vmem [shape: f32[3,128], index: 2, kind: input, shape index: {}]
  %s3 = inlined_call_operand.vmem [shape: bf16[256,128], index: 3, kind: output, shape index: {}]
  %s4 = sld [smem:[#allocation0]]
  $region45: #{dqn_forward.1} parent=0
    _
  %s6 = ssub.s32 1, %s4
  %s7 = scalar_select 0, %s6, %s4
  loop: start=0, step=1, limit=4
  $region2: #{dqn_forward.1} parent=0 // loop_pre_header
    _
  $region3: #{dqn_forward.1} parent=0 // loop_header
    %s9 = sphi 0, %s13
    %p10 = scmp.ge.s32.totalorder %s9, 4
    %s19 = sphi 0, %s21
    %s22 = sphi 0, %s19
    %s23 = sphi 0, %s22
    %s39 = sphi 0, %s23
    %s43 = sphi 0, %s43
    %s45 = sphi 0, %s43
    %s46 = sphi 0, %s45
    %s60 = sphi 0, %s46
    %s64 = sphi 0, %s64
    %s66 = sphi 0, %s64
    %s67 = sphi 0, %s66
    %s81 = sphi 0, %s67
    %s87 = sphi 0, %s89
    %s90 = sphi 0, %s87
    %s91 = sphi 0, %s90
    %s107 = sphi 0, %s91
  $region4: #{dqn_forward.1} parent=0 // loop_header_branch
    %12 = sbr.rel (%p10) target = $region8
  $region5: #{dqn_forward.1} parent=0 // loop_body
    %s14 = ssub.s32 %s9, 1
    %s15 = ssub.s32 %s9, 2
    %s16 = sadd.s32 %s9, 1
    %s17 = ssub.s32 %s9, %s16
    %p18 = scmp.eq.s32.totalorder %s17, 0
    %s20 = sadd.s32 %s19, 1
    %s21 = scalar_select %p18, %s19, %s20
    %p24 = pneg %p18
    %p25 = scmp.eq.s32.totalorder %s9, 1
    %p26 = por %p24, %p25
    %p27 = scmp.ne.s32.totalorder %s19, %s22
    %p28 = scmp.eq.s32.totalorder %s9, 0
    %p29 = por %p27, %p28
    %p30 = scmp.ne.s32.totalorder %s19, %s22
    %p31 = scmp.eq.s32.totalorder %s14, 1
    %p32 = por %p30, %p31
    %p33 = scmp.ne.s32.totalorder %s22, %s23
    %p34 = scmp.eq.s32.totalorder %s14, 0
    %p35 = por %p33, %p34
    %p36 = scmp.ne.s32.totalorder %s22, %s23
    %p37 = scmp.eq.s32.totalorder %s15, 1
    %p38 = por %p36, %p37
    %p40 = scmp.ne.s32.totalorder %s23, %s39
    %p41 = scmp.eq.s32.totalorder %s15, 0
    %p42 = por %p40, %p41
    %s44 = sadd.s32 %s43, 1
    %p47 = scmp.eq.s32.totalorder %s9, 1
    %p48 = scmp.ne.s32.totalorder %s43, %s45
    %p49 = scmp.eq.s32.totalorder %s9, 0
    %p50 = por %p48, %p49
    %p51 = scmp.ne.s32.totalorder %s43, %s45
    %p52 = scmp.eq.s32.totalorder %s14, 1
    %p53 = por %p51, %p52
    %p54 = scmp.ne.s32.totalorder %s45, %s46
    %p55 = scmp.eq.s32.totalorder %s14, 0
    %p56 = por %p54, %p55
    %p57 = scmp.ne.s32.totalorder %s45, %s46
    %p58 = scmp.eq.s32.totalorder %s15, 1
    %p59 = por %p57, %p58
    %p61 = scmp.ne.s32.totalorder %s46, %s60
    %p62 = scmp.eq.s32.totalorder %s15, 0
    %p63 = por %p61, %p62
    %s65 = sadd.s32 %s64, 1
    %p68 = scmp.eq.s32.totalorder %s9, 1
    %p69 = scmp.ne.s32.totalorder %s64, %s66
    %p70 = scmp.eq.s32.totalorder %s9, 0
    %p71 = por %p69, %p70
    %p72 = scmp.ne.s32.totalorder %s64, %s66
    %p73 = scmp.eq.s32.totalorder %s14, 1
    %p74 = por %p72, %p73
    %p75 = scmp.ne.s32.totalorder %s66, %s67
    %p76 = scmp.eq.s32.totalorder %s14, 0
    %p77 = por %p75, %p76
    %p78 = scmp.ne.s32.totalorder %s66, %s67
    %p79 = scmp.eq.s32.totalorder %s15, 1
    %p80 = por %p78, %p79
    %p82 = scmp.ne.s32.totalorder %s67, %s81
    %p83 = scmp.eq.s32.totalorder %s15, 0
    %p84 = por %p82, %p83
    %s85 = ssub.s32 %s9, %s16
    %p86 = scmp.eq.s32.totalorder %s85, 0
    %s88 = sadd.s32 %s87, 1
    %s89 = scalar_select %p86, %s87, %s88
    %p92 = pneg %p86
    %p93 = scmp.eq.s32.totalorder %s9, 1
    %p94 = por %p92, %p93
    %p95 = scmp.ne.s32.totalorder %s87, %s90
    %p96 = scmp.eq.s32.totalorder %s9, 0
    %p97 = por %p95, %p96
    %p98 = scmp.ne.s32.totalorder %s87, %s90
    %p99 = scmp.eq.s32.totalorder %s14, 1
    %p100 = por %p98, %p99
    %p101 = scmp.ne.s32.totalorder %s90, %s91
    %p102 = scmp.eq.s32.totalorder %s14, 0
    %p103 = por %p101, %p102
    %p104 = scmp.ne.s32.totalorder %s90, %s91
    %p105 = scmp.eq.s32.totalorder %s15, 1
    %p106 = por %p104, %p105
    %p108 = scmp.ne.s32.totalorder %s91, %s107
    %p109 = scmp.eq.s32.totalorder %s15, 0
    %p110 = por %p108, %p109
    %p111 = scmp.le.s32.totalorder 1, %s9
    %p112 = scmp.lt.s32.totalorder %s9, 3
    %p113 = pnand %p111, %p112
    %p114 = pneg %p113
    // Predicated region
    $region9: #{dqn_forward.1} parent=5 // pred_check
      _
    $region10: #{dqn_forward.1} parent=5 // pred_check_branch
      %116 = sbr.rel (%p113) target = $region12
    $region11: #{dqn_forward.1} parent=5 // pred_region
      %s117 = ssub.s32 %s9, 1
      // Predicated region
      $region13: #{dqn_forward.1} parent=11 // pred_check
        %p118 = pneg %p56
      $region14: #{dqn_forward.1} parent=11 // pred_check_branch
        %120 = sbr.rel (%p118) target = $region16
      $region15: #{dqn_forward.1} parent=11 // pred_region
        _
      $region16: #{dqn_forward.1} parent=11 // pred_fallthru
        _
      // Predicated region
      $region17: #{dqn_forward.1} parent=11 // pred_check
        %p121 = pneg %p77
      $region18: #{dqn_forward.1} parent=11 // pred_check_branch
        %123 = sbr.rel (%p121) target = $region20
      $region19: #{dqn_forward.1} parent=11 // pred_region
        _
      $region20: #{dqn_forward.1} parent=11 // pred_fallthru
        _
    $region12: #{dqn_forward.1} parent=5 // pred_fallthru
      _
    %p124 = scmp.lt.s32.totalorder %s9, 2
    // Predicated region
    $region21: #{dqn_forward.1} parent=5 // pred_check
      %p125 = pneg %p124
    $region22: #{dqn_forward.1} parent=5 // pred_check_branch
      %127 = sbr.rel (%p125) target = $region24
    $region23: #{dqn_forward.1} parent=5 // pred_region
      // Predicated region
      $region25: #{dqn_forward.1} parent=23 // pred_check
        %p128 = pneg %p29
      $region26: #{dqn_forward.1} parent=23 // pred_check_branch
        %130 = sbr.rel (%p128) target = $region28
      $region27: #{dqn_forward.1} parent=23 // pred_region
        %s131 = smul.u32 16, %s9
        %p132 = scmp.lt.s32.totalorder %s131, 31
        %s133 = scalar_select %p132, %s131, 31
        %s134 = smul.addr %s133, 8
        %s135 = scalar_lea.vmem %s0, %s134
        %s136 = smul.u32 16, %s9
      $region28: #{dqn_forward.1} parent=23 // pred_fallthru
        _
    $region24: #{dqn_forward.1} parent=5 // pred_fallthru
      _
    %p137 = scmp.le.s32.totalorder 1, %s9
    %p138 = scmp.lt.s32.totalorder %s9, 3
    %p139 = pnand %p137, %p138
    %p140 = pneg %p139
    // Predicated region
    $region29: #{dqn_forward.1} parent=5 // pred_check
      _
    $region30: #{dqn_forward.1} parent=5 // pred_check_branch
      %142 = sbr.rel (%p139) target = $region32
    $region31: #{dqn_forward.1} parent=5 // pred_region
      %s143 = ssub.s32 %s9, 1
      %s144 = smul.u32 16, %s14
      %p145 = scmp.lt.s32.totalorder %s144, 31
      %s146 = scalar_select %p145, %s144, 31
      %s147 = smul.addr %s146, 8
      %s148 = scalar_lea.vmem %s0, %s147
      %p149 = pneg %p35
      %p150 = pneg %p32
      %p151 = pneg %p56
      %p152 = pneg %p53
      %p153 = pneg %p77
      %p154 = pneg %p74
      %p155 = pneg %p103
      %p156 = pneg %p100
      %s157 = smul.u32 16, %s14
      %p158 = scmp.lt.s32.totalorder %s157, 31
      %s159 = scalar_select %p158, %s157, 31
      %s160 = smul.addr %s159, 4
      %s161 = scalar_lea.vmem %s3, %s160
      %s162 = smul.u32 16, %s14
      %p163 = scmp.lt.s32.totalorder %s162, 31
      %s164 = scalar_select %p163, %s162, 31
      %s165 = smul.addr %s164, 8
      %s166 = scalar_lea.vmem %s0, %s165
      %s167 = smul.u32 16, %s14
      %s168 = smul.u32 16, %s14
      %p169 = scmp.lt.s32.totalorder %s168, 31
      %s170 = scalar_select %p169, %s168, 31
      %s171 = smul.addr %s170, 4
      %s172 = scalar_lea.vmem %s3, %s171
      %s173 = smul.u32 16, %s14
      %v175 = vld [vmem:[%s166] sm:$0xff]
      %v176 = vld [vmem:[%s166 + $0x8] sm:$0xff]
      %v177 = vld [vmem:[%s166 + $0x10] sm:$0xff]
      %v178 = vld [vmem:[%s166 + $0x18] sm:$0xff]
      %v179 = vld [vmem:[%s166 + $0x20] sm:$0xff]
      %v180 = vld [vmem:[%s166 + $0x28] sm:$0xff]
      %v181 = vld [vmem:[%s166 + $0x30] sm:$0xff]
      %v182 = vld [vmem:[%s166 + $0x38] sm:$0xff]
      %v183 = vld [vmem:[%s166 + $0x40] sm:$0xff]
      %v184 = vld [vmem:[%s166 + $0x48] sm:$0xff]
      %v185 = vld [vmem:[%s166 + $0x50] sm:$0xff]
      %v186 = vld [vmem:[%s166 + $0x58] sm:$0xff]
      %v187 = vld [vmem:[%s166 + $0x60] sm:$0xff]
      %v188 = vld [vmem:[%s166 + $0x68] sm:$0xff]
      %v189 = vld [vmem:[%s166 + $0x70] sm:$0xff]
      %v190 = vld [vmem:[%s166 + $0x78] sm:$0xff]
      %v191 = vpack.c.bf16 %v176, %v175
      %v192 = vpack.c.bf16 %v178, %v177
      %v193 = vpack.c.bf16 %v180, %v179
      %v194 = vpack.c.bf16 %v182, %v181
      %v195 = vpack.c.bf16 %v184, %v183
      %v196 = vpack.c.bf16 %v186, %v185
      %v197 = vpack.c.bf16 %v188, %v187
      %v198 = vpack.c.bf16 %v190, %v189
      %v199 = vld [vmem:[%s1] sm:$0xf]
      %v200 = vld [vmem:[%s1 + $0x4] sm:$0xf]
      %v201 = vld [vmem:[%s2] sm:$0x1]
      %v202 = vperm.slane %v201, 0
      %v205 = vunpack.c.l.b16 %v199
      %v206 = vunpack.c.l.b16 %v200
      %v207 = vpack.c.b16 %v206, %v205
      %vm209 = vcmask 130048
      %v211 = vsel %vm209, %v191, 0
      %v214 = vsel %vm209, %v192, 0
      %v217 = vsel %vm209, %v193, 0
      %v220 = vsel %vm209, %v194, 0
      %v223 = vsel %vm209, %v195, 0
      %v226 = vsel %vm209, %v196, 0
      %v229 = vsel %vm209, %v197, 0
      %v232 = vsel %vm209, %v198, 0
      %234 = vmatpush.bf16.msra.mxu0 0
      %235 = vmatpush.bf16.msra.mxu0 0
      %236 = vmatpush.bf16.msra.mxu0 0
      %237 = vmatpush.bf16.msra.mxu0 0
      %238 = vmatpush.bf16.msra.mxu0 0
      %239 = vmatpush.bf16.msra.mxu0 0
      %240 = vmatpush.bf16.msra.mxu0 0
      %241 = vmatpush.bf16.msra.mxu0 %v207
      %242 = vmatmul.bf16.gmra.mxu0 %v211
      %v243 = vpop.f32.mrf.mxu0
      %v244 = vadd.f32 %v202, %v243
      %v245 = vpop.f32.mrf.mxu0
      %v246 = vadd.f32 %v202, %v245
      %247 = vmatmul.bf16.gmra.mxu0 %v214
      %v248 = vpop.f32.mrf.mxu0
      %v249 = vadd.f32 %v202, %v248
      %v250 = vpop.f32.mrf.mxu0
      %v251 = vadd.f32 %v202, %v250
      %252 = vmatmul.bf16.gmra.mxu0 %v217
      %v253 = vpop.f32.mrf.mxu0
      %v254 = vadd.f32 %v202, %v253
      %v255 = vpop.f32.mrf.mxu0
      %v256 = vadd.f32 %v202, %v255
      %257 = vmatmul.bf16.gmra.mxu0 %v220
      %v258 = vpop.f32.mrf.mxu0
      %v259 = vadd.f32 %v202, %v258
      %v260 = vpop.f32.mrf.mxu0
      %v261 = vadd.f32 %v202, %v260
      %262 = vmatmul.bf16.gmra.mxu0 %v223
      %v263 = vpop.f32.mrf.mxu0
      %v264 = vadd.f32 %v202, %v263
      %v265 = vpop.f32.mrf.mxu0
      %v266 = vadd.f32 %v202, %v265
      %267 = vmatmul.bf16.gmra.mxu0 %v226
      %v268 = vpop.f32.mrf.mxu0
      %v269 = vadd.f32 %v202, %v268
      %v270 = vpop.f32.mrf.mxu0
      %v271 = vadd.f32 %v202, %v270
      %272 = vmatmul.bf16.gmra.mxu0 %v229
      %v273 = vpop.f32.mrf.mxu0
      %v274 = vadd.f32 %v202, %v273
      %v275 = vpop.f32.mrf.mxu0
      %v276 = vadd.f32 %v202, %v275
      %277 = vmatmul.bf16.gmra.mxu0 %v232
      %v278 = vpop.f32.mrf.mxu0
      %v279 = vadd.f32 %v202, %v278
      %v280 = vpop.f32.mrf.mxu0
      %v281 = vadd.f32 %v202, %v280
      %282 = vdwg.mxu0
      %v283 = vmax.f32 %v244, 0.0
      %v284 = vmax.f32 %v246, 0.0
      %v285 = vmax.f32 %v249, 0.0
      %v286 = vmax.f32 %v251, 0.0
      %v287 = vmax.f32 %v254, 0.0
      %v288 = vmax.f32 %v256, 0.0
      %v289 = vmax.f32 %v259, 0.0
      %v290 = vmax.f32 %v261, 0.0
      %v291 = vmax.f32 %v264, 0.0
      %v292 = vmax.f32 %v266, 0.0
      %v293 = vmax.f32 %v269, 0.0
      %v294 = vmax.f32 %v271, 0.0
      %v295 = vmax.f32 %v274, 0.0
      %v296 = vmax.f32 %v276, 0.0
      %v297 = vmax.f32 %v279, 0.0
      %v298 = vmax.f32 %v281, 0.0
      %v299 = vpack.c.bf16 %v284, %v283
      %v300 = vpack.c.bf16 %v286, %v285
      %v301 = vpack.c.bf16 %v288, %v287
      %v302 = vpack.c.bf16 %v290, %v289
      %v303 = vpack.c.bf16 %v292, %v291
      %v304 = vpack.c.bf16 %v294, %v293
      %v305 = vpack.c.bf16 %v296, %v295
      %v306 = vpack.c.bf16 %v298, %v297
      %s307 = scalar_lea.vmem %s1, 64
      %v308 = vld [vmem:[%s307] sm:$0xf]
      %v309 = vld [vmem:[%s307 + $0x4] sm:$0xf]
      %v310 = vld [vmem:[%s307 + $0x8] sm:$0xf]
      %v311 = vld [vmem:[%s307 + $0xc] sm:$0xf]
      %v312 = vld [vmem:[%s307 + $0x10] sm:$0xf]
      %v313 = vld [vmem:[%s307 + $0x14] sm:$0xf]
      %v314 = vld [vmem:[%s307 + $0x18] sm:$0xf]
      %v315 = vld [vmem:[%s307 + $0x1c] sm:$0xf]
      %v316 = vld [vmem:[%s307 + $0x20] sm:$0xf]
      %v317 = vld [vmem:[%s307 + $0x24] sm:$0xf]
      %v318 = vld [vmem:[%s307 + $0x28] sm:$0xf]
      %v319 = vld [vmem:[%s307 + $0x2c] sm:$0xf]
      %v320 = vld [vmem:[%s307 + $0x30] sm:$0xf]
      %v321 = vld [vmem:[%s307 + $0x34] sm:$0xf]
      %v322 = vld [vmem:[%s307 + $0x38] sm:$0xf]
      %v323 = vld [vmem:[%s307 + $0x3c] sm:$0xf]
      %v324 = vld [vmem:[%s2 + $0x1] sm:$0x1]
      %v325 = vperm.slane %v324, 0
      %v342 = vunpack.c.l.b16 %v308
      %v343 = vunpack.c.l.b16 %v309
      %v344 = vunpack.c.l.b16 %v310
      %v345 = vunpack.c.l.b16 %v311
      %v346 = vunpack.c.l.b16 %v312
      %v347 = vunpack.c.l.b16 %v313
      %v348 = vunpack.c.l.b16 %v314
      %v349 = vunpack.c.l.b16 %v315
      %v350 = vunpack.c.l.b16 %v316
      %v351 = vunpack.c.l.b16 %v317
      %v352 = vunpack.c.l.b16 %v318
      %v353 = vunpack.c.l.b16 %v319
      %v354 = vunpack.c.l.b16 %v320
      %v355 = vunpack.c.l.b16 %v321
      %v356 = vunpack.c.l.b16 %v322
      %v357 = vunpack.c.l.b16 %v323
      %v358 = vpack.c.b16 %v343, %v342
      %v359 = vpack.c.b16 %v345, %v344
      %v360 = vpack.c.b16 %v347, %v346
      %v361 = vpack.c.b16 %v349, %v348
      %v362 = vpack.c.b16 %v351, %v350
      %v363 = vpack.c.b16 %v353, %v352
      %v364 = vpack.c.b16 %v355, %v354
      %v365 = vpack.c.b16 %v357, %v356
      %374 = vmatpush.bf16.msra.mxu0 %v365
      %375 = vmatpush.bf16.msra.mxu0 %v364
      %376 = vmatpush.bf16.msra.mxu0 %v363
      %377 = vmatpush.bf16.msra.mxu0 %v362
      %378 = vmatpush.bf16.msra.mxu0 %v361
      %379 = vmatpush.bf16.msra.mxu0 %v360
      %380 = vmatpush.bf16.msra.mxu0 %v359
      %381 = vmatpush.bf16.msra.mxu0 %v358
      %382 = vmatmul.bf16.gmra.mxu0 %v299
      %v383 = vpop.f32.mrf.mxu0
      %v384 = vadd.f32 %v325, %v383
      %v385 = vpop.f32.mrf.mxu0
      %v386 = vadd.f32 %v325, %v385
      %387 = vmatmul.bf16.gmra.mxu0 %v300
      %v388 = vpop.f32.mrf.mxu0
      %v389 = vadd.f32 %v325, %v388
      %v390 = vpop.f32.mrf.mxu0
      %v391 = vadd.f32 %v325, %v390
      %392 = vmatmul.bf16.gmra.mxu0 %v301
      %v393 = vpop.f32.mrf.mxu0
      %v394 = vadd.f32 %v325, %v393
      %v395 = vpop.f32.mrf.mxu0
      %v396 = vadd.f32 %v325, %v395
      %397 = vmatmul.bf16.gmra.mxu0 %v302
      %v398 = vpop.f32.mrf.mxu0
      %v399 = vadd.f32 %v325, %v398
      %v400 = vpop.f32.mrf.mxu0
      %v401 = vadd.f32 %v325, %v400
      %402 = vmatmul.bf16.gmra.mxu0 %v303
      %v403 = vpop.f32.mrf.mxu0
      %v404 = vadd.f32 %v325, %v403
      %v405 = vpop.f32.mrf.mxu0
      %v406 = vadd.f32 %v325, %v405
      %407 = vmatmul.bf16.gmra.mxu0 %v304
      %v408 = vpop.f32.mrf.mxu0
      %v409 = vadd.f32 %v325, %v408
      %v410 = vpop.f32.mrf.mxu0
      %v411 = vadd.f32 %v325, %v410
      %412 = vmatmul.bf16.gmra.mxu0 %v305
      %v413 = vpop.f32.mrf.mxu0
      %v414 = vadd.f32 %v325, %v413
      %v415 = vpop.f32.mrf.mxu0
      %v416 = vadd.f32 %v325, %v415
      %417 = vmatmul.bf16.gmra.mxu0 %v306
      %v418 = vpop.f32.mrf.mxu0
      %v419 = vadd.f32 %v325, %v418
      %v420 = vpop.f32.mrf.mxu0
      %v421 = vadd.f32 %v325, %v420
      %422 = vdwg.mxu0
      %v423 = vmax.f32 %v384, 0.0
      %v424 = vmax.f32 %v386, 0.0
      %v425 = vmax.f32 %v389, 0.0
      %v426 = vmax.f32 %v391, 0.0
      %v427 = vmax.f32 %v394, 0.0
      %v428 = vmax.f32 %v396, 0.0
      %v429 = vmax.f32 %v399, 0.0
      %v430 = vmax.f32 %v401, 0.0
      %v431 = vmax.f32 %v404, 0.0
      %v432 = vmax.f32 %v406, 0.0
      %v433 = vmax.f32 %v409, 0.0
      %v434 = vmax.f32 %v411, 0.0
      %v435 = vmax.f32 %v414, 0.0
      %v436 = vmax.f32 %v416, 0.0
      %v437 = vmax.f32 %v419, 0.0
      %v438 = vmax.f32 %v421, 0.0
      %v439 = vpack.c.bf16 %v424, %v423
      %v440 = vpack.c.bf16 %v426, %v425
      %v441 = vpack.c.bf16 %v428, %v427
      %v442 = vpack.c.bf16 %v430, %v429
      %v443 = vpack.c.bf16 %v432, %v431
      %v444 = vpack.c.bf16 %v434, %v433
      %v445 = vpack.c.bf16 %v436, %v435
      %v446 = vpack.c.bf16 %v438, %v437
      %s447 = scalar_lea.vmem %s1, 128
      %v448 = vld [vmem:[%s447] sm:$0xf]
      %v449 = vld [vmem:[%s447 + $0x4] sm:$0xf]
      %v450 = vld [vmem:[%s447 + $0x8] sm:$0xf]
      %v451 = vld [vmem:[%s447 + $0xc] sm:$0xf]
      %v452 = vld [vmem:[%s447 + $0x10] sm:$0xf]
      %v453 = vld [vmem:[%s447 + $0x14] sm:$0xf]
      %v454 = vld [vmem:[%s447 + $0x18] sm:$0xf]
      %v455 = vld [vmem:[%s447 + $0x1c] sm:$0xf]
      %v456 = vld [vmem:[%s447 + $0x20] sm:$0xf]
      %v457 = vld [vmem:[%s447 + $0x24] sm:$0xf]
      %v458 = vld [vmem:[%s447 + $0x28] sm:$0xf]
      %v459 = vld [vmem:[%s447 + $0x2c] sm:$0xf]
      %v460 = vld [vmem:[%s447 + $0x30] sm:$0xf]
      %v461 = vld [vmem:[%s447 + $0x34] sm:$0xf]
      %v462 = vld [vmem:[%s447 + $0x38] sm:$0xf]
      %v463 = vld [vmem:[%s447 + $0x3c] sm:$0xf]
      %v464 = vld [vmem:[%s2 + $0x2] sm:$0x1]
      %v465 = vperm.slane %v464, 0
      %v482 = vunpack.c.l.b16 %v448
      %v483 = vunpack.c.l.b16 %v449
      %v484 = vunpack.c.l.b16 %v450
      %v485 = vunpack.c.l.b16 %v451
      %v486 = vunpack.c.l.b16 %v452
      %v487 = vunpack.c.l.b16 %v453
      %v488 = vunpack.c.l.b16 %v454
      %v489 = vunpack.c.l.b16 %v455
      %v490 = vunpack.c.l.b16 %v456
      %v491 = vunpack.c.l.b16 %v457
      %v492 = vunpack.c.l.b16 %v458
      %v493 = vunpack.c.l.b16 %v459
      %v494 = vunpack.c.l.b16 %v460
      %v495 = vunpack.c.l.b16 %v461
      %v496 = vunpack.c.l.b16 %v462
      %v497 = vunpack.c.l.b16 %v463
      %v498 = vpack.c.b16 %v483, %v482
      %v499 = vpack.c.b16 %v485, %v484
      %v500 = vpack.c.b16 %v487, %v486
      %v501 = vpack.c.b16 %v489, %v488
      %v502 = vpack.c.b16 %v491, %v490
      %v503 = vpack.c.b16 %v493, %v492
      %v504 = vpack.c.b16 %v495, %v494
      %v505 = vpack.c.b16 %v497, %v496
      %514 = vmatpush.bf16.msra.mxu0 %v505
      %515 = vmatpush.bf16.msra.mxu0 %v504
      %516 = vmatpush.bf16.msra.mxu0 %v503
      %517 = vmatpush.bf16.msra.mxu0 %v502
      %518 = vmatpush.bf16.msra.mxu0 %v501
      %519 = vmatpush.bf16.msra.mxu0 %v500
      %520 = vmatpush.bf16.msra.mxu0 %v499
      %521 = vmatpush.bf16.msra.mxu0 %v498
      %522 = vmatmul.bf16.gmra.mxu0 %v439
      %v523 = vpop.f32.mrf.mxu0
      %v524 = vadd.f32 %v465, %v523
      %v525 = vpop.f32.mrf.mxu0
      %v526 = vadd.f32 %v465, %v525
      %527 = vmatmul.bf16.gmra.mxu0 %v440
      %v528 = vpop.f32.mrf.mxu0
      %v529 = vadd.f32 %v465, %v528
      %v530 = vpop.f32.mrf.mxu0
      %v531 = vadd.f32 %v465, %v530
      %532 = vmatmul.bf16.gmra.mxu0 %v441
      %v533 = vpop.f32.mrf.mxu0
      %v534 = vadd.f32 %v465, %v533
      %v535 = vpop.f32.mrf.mxu0
      %v536 = vadd.f32 %v465, %v535
      %537 = vmatmul.bf16.gmra.mxu0 %v442
      %v538 = vpop.f32.mrf.mxu0
      %v539 = vadd.f32 %v465, %v538
      %v540 = vpop.f32.mrf.mxu0
      %v541 = vadd.f32 %v465, %v540
      %542 = vmatmul.bf16.gmra.mxu0 %v443
      %v543 = vpop.f32.mrf.mxu0
      %v544 = vadd.f32 %v465, %v543
      %v545 = vpop.f32.mrf.mxu0
      %v546 = vadd.f32 %v465, %v545
      %547 = vmatmul.bf16.gmra.mxu0 %v444
      %v548 = vpop.f32.mrf.mxu0
      %v549 = vadd.f32 %v465, %v548
      %v550 = vpop.f32.mrf.mxu0
      %v551 = vadd.f32 %v465, %v550
      %552 = vmatmul.bf16.gmra.mxu0 %v445
      %v553 = vpop.f32.mrf.mxu0
      %v554 = vadd.f32 %v465, %v553
      %v555 = vpop.f32.mrf.mxu0
      %v556 = vadd.f32 %v465, %v555
      %557 = vmatmul.bf16.gmra.mxu0 %v446
      %v558 = vpop.f32.mrf.mxu0
      %v559 = vadd.f32 %v465, %v558
      %v560 = vpop.f32.mrf.mxu0
      %v561 = vadd.f32 %v465, %v560
      %562 = vdwg.mxu0
      %v563 = vpack.c.bf16 %v524, %v524
      %v564 = vpack.c.bf16 %v526, %v526
      %v565 = vpack.c.bf16 %v529, %v529
      %v566 = vpack.c.bf16 %v531, %v531
      %v567 = vpack.c.bf16 %v534, %v534
      %v568 = vpack.c.bf16 %v536, %v536
      %v569 = vpack.c.bf16 %v539, %v539
      %v570 = vpack.c.bf16 %v541, %v541
      %v571 = vpack.c.bf16 %v544, %v544
      %v572 = vpack.c.bf16 %v546, %v546
      %v573 = vpack.c.bf16 %v549, %v549
      %v574 = vpack.c.bf16 %v551, %v551
      %v575 = vpack.c.bf16 %v554, %v554
      %v576 = vpack.c.bf16 %v556, %v556
      %v577 = vpack.c.bf16 %v559, %v559
      %v578 = vpack.c.bf16 %v561, %v561
      %579 = vst [vmem:[%s172] sm:$0xf] %v563
      %580 = vst [vmem:[%s172 + $0x4] sm:$0xf] %v564
      %581 = vst [vmem:[%s172 + $0x8] sm:$0xf] %v565
      %582 = vst [vmem:[%s172 + $0xc] sm:$0xf] %v566
      %583 = vst [vmem:[%s172 + $0x10] sm:$0xf] %v567
      %584 = vst [vmem:[%s172 + $0x14] sm:$0xf] %v568
      %585 = vst [vmem:[%s172 + $0x18] sm:$0xf] %v569
      %586 = vst [vmem:[%s172 + $0x1c] sm:$0xf] %v570
      %587 = vst [vmem:[%s172 + $0x20] sm:$0xf] %v571
      %588 = vst [vmem:[%s172 + $0x24] sm:$0xf] %v572
      %589 = vst [vmem:[%s172 + $0x28] sm:$0xf] %v573
      %590 = vst [vmem:[%s172 + $0x2c] sm:$0xf] %v574
      %591 = vst [vmem:[%s172 + $0x30] sm:$0xf] %v575
      %592 = vst [vmem:[%s172 + $0x34] sm:$0xf] %v576
      %593 = vst [vmem:[%s172 + $0x38] sm:$0xf] %v577
      %594 = vst [vmem:[%s172 + $0x3c] sm:$0xf] %v578
      %s595 = smul.u32 16, %s14
      %p596 = scmp.lt.s32.totalorder %s595, 31
      %s597 = scalar_select %p596, %s595, 31
      %s598 = smul.addr %s597, 4
      %s599 = scalar_lea.vmem %s3, %s598
      // Predicated region
      $region33: #{dqn_forward.1} parent=31 // pred_check
        %p600 = pneg %p100
      $region34: #{dqn_forward.1} parent=31 // pred_check_branch
        %602 = sbr.rel (%p600) target = $region36
      $region35: #{dqn_forward.1} parent=31 // pred_region
        %s603 = smul.u32 16, %s14
      $region36: #{dqn_forward.1} parent=31 // pred_fallthru
        _
    $region32: #{dqn_forward.1} parent=5 // pred_fallthru
      _
    %p604 = scmp.le.s32.totalorder 2, %s9
    // Predicated region
    $region37: #{dqn_forward.1} parent=5 // pred_check
      %p605 = pneg %p604
    $region38: #{dqn_forward.1} parent=5 // pred_check_branch
      %607 = sbr.rel (%p605) target = $region40
    $region39: #{dqn_forward.1} parent=5 // pred_region
      %s608 = ssub.s32 %s9, 2
      // Predicated region
      $region41: #{dqn_forward.1} parent=39 // pred_check
        %p609 = pneg %p106
      $region42: #{dqn_forward.1} parent=39 // pred_check_branch
        %611 = sbr.rel (%p609) target = $region44
      $region43: #{dqn_forward.1} parent=39 // pred_region
        %s612 = smul.u32 16, %s15
        %p613 = scmp.lt.s32.totalorder %s612, 31
        %s614 = scalar_select %p613, %s612, 31
        %s615 = smul.addr %s614, 4
        %s616 = scalar_lea.vmem %s3, %s615
      $region44: #{dqn_forward.1} parent=39 // pred_fallthru
        _
    $region40: #{dqn_forward.1} parent=5 // pred_fallthru
      _
  $region6: #{dqn_forward.1} parent=0 // loop_footer
    %s13 = sadd.s32 1, %s9
  $region7: #{dqn_forward.1} parent=0 // loop_footer_branch
    %8 = sbr.rel target = $region3
  $region8: #{dqn_forward.1} parent=0 // loop_exit
    _

</llo_original>
